<compile_context>
chip_gen: v7x
topology: tpu7x:2x2x1
jax: 0.10.0
libtpu: 0.0.40
codegen_flags: <defaults>
</compile_context>

<pallas_src>
import functools

import jax
import jax.numpy as jnp
from jax.experimental import pallas as pl
from jax.experimental.pallas import tpu as pltpu

NEG_SLOPE = 0.01   # nn.LeakyReLU default
BN_EPS = 1e-5      # nn.BatchNorm2d default


# --------------------------------------------------------------------------
# Pass 1: conv (3x3, stride-2, reflect-padded, no bias) + BN partial stats
# --------------------------------------------------------------------------
def conv_stats_kernel(planes_ref, w_ref, conv_ref, stats_ref):
    # planes_ref: (1, 1, 6*Cin, TH+1, Wo)  pre-shifted parity planes, one tile
    #             plane p = 3*(h_parity) + col_variant, col variants:
    #             0: w-even cols j, 1: w-odd cols j, 2: w-even cols j+1
    # w_ref     : (Cout, 9*Cin)  tap-major (dy, dx), Cin-minor conv weights
    # conv_ref  : (1, Cout, TH*Wo)  un-normalized conv tile (M on lanes)
    # stats_ref : (1, 1, Cout, 2)   per-channel [sum, sum_sq] for this tile
    _, _, c6, th1, wo = planes_ref.shape
    cin = c6 // 6
    th = th1 - 1

    planes = planes_ref[0, 0]                       # (6*Cin, TH+1, Wo)

    # im2col: 9 taps, each a contiguous channel-block + sublane row slice
    # (no lane shifts -- the dx=2 shift was done in the wrapper).
    taps = []
    for dy in range(3):
        rh = dy // 2                                # +1 row only for dy == 2
        base = 3 * (dy % 2)                         # 0: h-even, 3: h-odd
        for dx in range(3):
            p = base + dx
            taps.append(planes[p * cin:(p + 1) * cin, rh:rh + th, :])
    # (9*Cin, TH, Wo) -> (9*Cin, TH*Wo); free relayout when Wo % 128 == 0.
    patches = jnp.concatenate(taps, axis=0).reshape(9 * cin, th * wo)

    # One MXU matmul, K = 9*Cin, lane-dense (Cout, M_tile) result.
    # Kept in f32 to preserve PyTorch f32 numerics (bf16 operands would be the
    # v6e/v7x-preferred MXU path for large C but breaks the 1e-4 parity check).
    conv = jnp.dot(w_ref[...], patches, preferred_element_type=jnp.float32)
    conv_ref[0] = conv

    # Single-pass BN partials (sum, sum_sq); f32 accumulation.  Note: the
    # E[x^2]-E[x]^2 formulation can lose precision at very large N*M.
    s = jnp.sum(conv, axis=1, keepdims=True)                # (Cout, 1)
    ss = jnp.sum(conv * conv, axis=1, keepdims=True)        # (Cout, 1)
    stats_ref[0, 0] = jnp.concatenate([s, ss], axis=1)      # (Cout, 2)


# --------------------------------------------------------------------------
# Pass 2: y = conv * scale + shift ; LeakyReLU   (pure element-wise)
# --------------------------------------------------------------------------
def bn_lrelu_kernel(conv_ref, ss_ref, o_ref):
    # conv_ref/o_ref: (1, C, M_tile)   ss_ref: (C, 2) packed [scale, shift]
    scale = ss_ref[:, 0:1]
    shift = ss_ref[:, 1:2]
    y = conv_ref[0] * scale + shift
    o_ref[0] = jnp.where(y > 0, y, NEG_SLOPE * y)


# --------------------------------------------------------------------------
# Wrapper
# --------------------------------------------------------------------------
def _vmem_limit_bytes():
    try:
        cap = pltpu.get_tpu_info().vmem_capacity_bytes
        return min(100 * 1024 * 1024, (3 * cap) // 4)
    except Exception:                    # pragma: no cover - conservative
        return 48 * 1024 * 1024          # safe on v7x's 64 MiB VMEM


def _pick_row_tile(ho, wo, cin, budget_bytes):
    """Largest row-tile TH with TH | Ho, TH*Wo within budget, and (if tiled)
    TH*Wo a multiple of 128 so the (1, C, TH*Wo) blocks stay lane-dense."""
    # rough f32 bytes per output lane: 2x double-buffered 6C planes + 9C
    # patches + 2x conv tile (+ margin)
    bytes_per_lane = 4 * cin * (2 * 6 + 9 + 2 + 1)
    m_target = max(wo, budget_bytes // max(1, bytes_per_lane))
    cap = max(1, m_target // wo)
    if cap >= ho:
        return ho
    for th in range(min(cap, ho), 0, -1):
        if ho % th == 0 and (th * wo) % 128 == 0:
            return th
    # TODO(synk): also tile along Wo (with column masking) when even a single
    #             row of a 128-aligned tile cannot be formed within budget.
    return ho


def _downsample(x_nchw, w_oihw, gamma, beta):
    """Forward of DownSample. x_nchw: (N, C, H, W) float32 (PyTorch layout)."""
    N, C, H, W = x_nchw.shape
    Ho = (H - 1) // 2 + 1
    Wo = (W - 1) // 2 + 1
    M = Ho * Wo

    # ---- wrapper prework: reflect-pad, parity + column-shift deinterleave --
    xp = jnp.pad(x_nchw, ((0, 0), (0, 0), (1, 1), (1, 1)), mode="reflect")

    he = xp[:, :, 0::2, :]                               # (N, C, Ho+1, W+2)
    ho_pl = xp[:, :, 1::2, :]
    if ho_pl.shape[2] < Ho + 1:                          # odd H: pad, never read
        ho_pl = jnp.pad(ho_pl, ((0, 0), (0, 0), (0, Ho + 1 - ho_pl.shape[2]), (0, 0)))

    def col_variants(p):
        we = p[:, :, :, 0::2]                            # (..., Wo+1)
        wd = p[:, :, :, 1::2]                            # (..., Wo or Wo+1)
        return (we[:, :, :, :Wo],                        # dx = 0
                wd[:, :, :, :Wo],                        # dx = 1
                we[:, :, :, 1:Wo + 1])                   # dx = 2 (pre-shifted)

    he0, he1, he2 = col_variants(he)
    ho0, ho1, ho2 = col_variants(ho_pl)
    # One stacked operand -> one pipelined DMA per grid step.
    planes = jnp.stack([he0, he1, he2, ho0, ho1, ho2], axis=1)   # (N,6,C,Ho+1,Wo)
    planes = planes.reshape(N, 6 * C, Ho + 1, Wo)

    # ---- tiling derived from the per-chip VMEM budget -----------------------
    vmem_limit = _vmem_limit_bytes()
    th = _pick_row_tile(Ho, Wo, C, vmem_limit // 2)
    n_t = Ho // th
    MT = th * Wo                                         # lanes per tile

    if n_t == 1:
        planes_t = planes[:, None]                       # (N, 1, 6C, Ho+1, Wo)
    else:
        # Pre-gather overlapping row tiles (overlap = 1 row) so BlockSpec
        # blocking stays plain Blocked dims.
        planes_t = jnp.stack(
            [planes[:, :, t * th:t * th + th + 1, :] for t in range(n_t)],
            axis=1)                                      # (N, n_t, 6C, TH+1, Wo)

    # (Cout, Cin, 3, 3) -> (Cout, 9*Cin), tap-major then Cin (matches im2col).
    w2 = jnp.transpose(w_oihw, (0, 2, 3, 1)).reshape(C, 9 * C)

    cparams = pltpu.CompilerParams(
        dimension_semantics=("parallel", "parallel"),    # shards across TCs
        vmem_limit_bytes=vmem_limit)

    conv_flat, partial_stats = pl.pallas_call(
        conv_stats_kernel,
        out_shape=(jax.ShapeDtypeStruct((N, C, M), jnp.float32),
                   jax.ShapeDtypeStruct((N, n_t, C, 2), jnp.float32)),
        grid=(N, n_t),
        in_specs=[pl.BlockSpec((1, 1, 6 * C, th + 1, Wo),
                               lambda n, t: (n, t, 0, 0, 0)),
                  pl.BlockSpec((C, 9 * C), lambda n, t: (0, 0))],
        out_specs=(pl.BlockSpec((1, C, MT), lambda n, t: (n, 0, t)),
                   pl.BlockSpec((1, 1, C, 2), lambda n, t: (n, t, 0, 0))),
        compiler_params=cparams,
    )(planes_t, w2)

    # Fold partial stats into per-channel BN affine (tiny per-channel glue).
    totals = jnp.sum(partial_stats, axis=(0, 1))         # (C, 2)
    count = float(N * M)
    mean = totals[:, 0] / count
    var = totals[:, 1] / count - mean * mean              # biased (train BN)
    inv = jax.lax.rsqrt(var + BN_EPS)
    scale = gamma * inv
    shift = beta - mean * scale
    scale_shift = jnp.stack([scale, shift], axis=1)       # (C, 2) packed

    out_flat = pl.pallas_call(
        bn_lrelu_kernel,
        out_shape=jax.ShapeDtypeStruct((N, C, M), jnp.float32),
        grid=(N, n_t),
        in_specs=[pl.BlockSpec((1, C, MT), lambda n, t: (n, 0, t)),
                  pl.BlockSpec((C, 2), lambda n, t: (0, 0))],
        out_specs=pl.BlockSpec((1, C, MT), lambda n, t: (n, 0, t)),
        input_output_aliases={0: 0},                      # write over conv_flat
        compiler_params=cparams,
    )(conv_flat, scale_shift)

    # (N, C, Ho*Wo) is NCHW-flattened: free reshape, no transpose.
    return out_flat.reshape(N, C, Ho, Wo)


downsample = jax.jit(_downsample)


# --------------------------------------------------------------------------
# Pure-JAX reference of the PyTorch forward (train-mode BN)
# --------------------------------------------------------------------------
def downsample_reference(x_nchw, w_oihw, gamma, beta):
    N, C, H, W = x_nchw.shape
    x_nhwc = jnp.transpose(x_nchw, (0, 2, 3, 1))
    xp = jnp.pad(x_nhwc, ((0, 0), (1, 1), (1, 1), (0, 0)), mode="reflect")
    w_hwio = jnp.transpose(w_oihw, (2, 3, 1, 0))
    conv = jax.lax.conv_general_dilated(
        xp, w_hwio, window_strides=(2, 2), padding="VALID",
        dimension_numbers=("NHWC", "HWIO", "NHWC"))
    mean = jnp.mean(conv, axis=(0, 1, 2), keepdims=True)
    var = jnp.mean((conv - mean) ** 2, axis=(0, 1, 2), keepdims=True)
    y = (conv - mean) * jax.lax.rsqrt(var + BN_EPS)
    y = y * gamma.reshape(1, 1, 1, C) + beta.reshape(1, 1, 1, C)
    y = jnp.where(y > 0, y, NEG_SLOPE * y)
    return jnp.transpose(y, (0, 3, 1, 2))


if __name__ == "__main__":
    key = jax.random.PRNGKey(0)
    k_x, k_w, k_g, k_b = jax.random.split(key, 4)

    N, C, H, W = 2, 4, 16, 16
    x = jax.random.normal(k_x, (N, C, H, W), dtype=jnp.float32)
    # Conv2d(channel, channel, 3) weight: (Cout, Cin, 3, 3), bias=False
    w = jax.random.normal(k_w, (C, C, 3, 3), dtype=jnp.float32) * 0.2
    # BatchNorm2d affine params (deterministic synthetic init)
    gamma = 1.0 + 0.1 * jax.random.normal(k_g, (C,), dtype=jnp.float32)
    beta = 0.1 * jax.random.normal(k_b, (C,), dtype=jnp.float32)

    out = jax.block_until_ready(downsample(x, w, gamma, beta))
    ref = jax.block_until_ready(downsample_reference(x, w, gamma, beta))

    assert out.shape == (N, C, H // 2, W // 2), out.shape
    assert jnp.allclose(out, ref, atol=1e-4, rtol=1e-4), \
        float(jnp.max(jnp.abs(out - ref)))

    print("KERNEL_OK")
</pallas_src>

<mosaic_0001>
module attributes {stable_mosaic.version = 11 : i64} {
  func.func @conv_stats_kernel(%arg0: i32, %arg1: i32, %arg2: memref<1x1x24x9x8xf32, #tpu.memory_space<vmem>>, %arg3: memref<4x36xf32, #tpu.memory_space<vmem>>, %arg4: memref<1x4x64xf32, #tpu.memory_space<vmem>>, %arg5: memref<1x1x4x2xf32, #tpu.memory_space<vmem>>) attributes {dimension_semantics = [#tpu.dimension_semantics<parallel>, #tpu.dimension_semantics<parallel>], iteration_bounds = array<i64: 2, 1>, scalar_prefetch = 0 : i64, scratch_operands = 0 : i64, tpu.core_type = #tpu.core_type<tc>, window_params = [{transform_indices = @transform_0, window_bounds = array<i64: 1, 1, 24, 9, 8>}, {pipeline_mode = #tpu.pipeline_mode<synchronous>, transform_indices = @transform_1, window_bounds = array<i64: 4, 36>}, {transform_indices = @transform_2, window_bounds = array<i64: 1, 4, 64>}, {transform_indices = @transform_3, window_bounds = array<i64: 1, 1, 4, 2>}]} {
    %c0 = arith.constant 0 : index
    %c0_0 = arith.constant 0 : index
    %c0_1 = arith.constant 0 : index
    %c0_2 = arith.constant 0 : index
    %c0_3 = arith.constant 0 : index
    %0 = vector.load %arg2[%c0, %c0_0, %c0_1, %c0_2, %c0_3] : memref<1x1x24x9x8xf32, #tpu.memory_space<vmem>>, vector<1x1x24x9x8xf32>
    %1 = vector.shape_cast %0 : vector<1x1x24x9x8xf32> to vector<24x9x8xf32>
    %2 = vector.extract_strided_slice %1 {offsets = [0, 0, 0], sizes = [4, 8, 8], strides = [1, 1, 1]} : vector<24x9x8xf32> to vector<4x8x8xf32>
    %3 = vector.extract_strided_slice %1 {offsets = [4, 0, 0], sizes = [4, 8, 8], strides = [1, 1, 1]} : vector<24x9x8xf32> to vector<4x8x8xf32>
    %4 = vector.extract_strided_slice %1 {offsets = [8, 0, 0], sizes = [4, 8, 8], strides = [1, 1, 1]} : vector<24x9x8xf32> to vector<4x8x8xf32>
    %5 = vector.extract_strided_slice %1 {offsets = [12, 0, 0], sizes = [4, 8, 8], strides = [1, 1, 1]} : vector<24x9x8xf32> to vector<4x8x8xf32>
    %6 = vector.extract_strided_slice %1 {offsets = [16, 0, 0], sizes = [4, 8, 8], strides = [1, 1, 1]} : vector<24x9x8xf32> to vector<4x8x8xf32>
    %7 = vector.extract_strided_slice %1 {offsets = [20, 0, 0], sizes = [4, 8, 8], strides = [1, 1, 1]} : vector<24x9x8xf32> to vector<4x8x8xf32>
    %8 = vector.extract_strided_slice %1 {offsets = [0, 1, 0], sizes = [4, 8, 8], strides = [1, 1, 1]} : vector<24x9x8xf32> to vector<4x8x8xf32>
    %9 = vector.extract_strided_slice %1 {offsets = [4, 1, 0], sizes = [4, 8, 8], strides = [1, 1, 1]} : vector<24x9x8xf32> to vector<4x8x8xf32>
    %10 = vector.extract_strided_slice %1 {offsets = [8, 1, 0], sizes = [4, 8, 8], strides = [1, 1, 1]} : vector<24x9x8xf32> to vector<4x8x8xf32>
    %11 = tpu.concatenate %2, %3, %4, %5, %6, %7, %8, %9, %10 in 0 : vector<4x8x8xf32>, vector<4x8x8xf32>, vector<4x8x8xf32>, vector<4x8x8xf32>, vector<4x8x8xf32>, vector<4x8x8xf32>, vector<4x8x8xf32>, vector<4x8x8xf32>, vector<4x8x8xf32> -> vector<36x8x8xf32>
    %12 = vector.shape_cast %11 : vector<36x8x8xf32> to vector<36x64xf32>
    %c0_4 = arith.constant 0 : index
    %c0_5 = arith.constant 0 : index
    %13 = vector.load %arg3[%c0_4, %c0_5] : memref<4x36xf32, #tpu.memory_space<vmem>>, vector<4x36xf32>
    %cst = arith.constant dense<0.000000e+00> : vector<4x64xf32>
    %14 = tpu.matmul %13, %12, %cst {dimension_numbers = #tpu.dot_dimension_numbers<[1], [0], [0], [1], [0, 0, 1, 1], [], []>} : vector<4x36xf32>, vector<36x64xf32>, vector<4x64xf32> -> vector<4x64xf32>
    %c0_6 = arith.constant 0 : index
    %c0_7 = arith.constant 0 : index
    %c0_8 = arith.constant 0 : index
    %15 = vector.load %arg4[%c0_6, %c0_7, %c0_8] : memref<1x4x64xf32, #tpu.memory_space<vmem>>, vector<1x4x64xf32>
    %16 = vector.shape_cast %15 : vector<1x4x64xf32> to vector<4x64xf32>
    %17 = vector.shape_cast %14 : vector<4x64xf32> to vector<1x4x64xf32>
    tpu.vector_store %arg4[%c0_6, %c0_7, %c0_8], %17 {strides = array<i32>} : memref<1x4x64xf32, #tpu.memory_space<vmem>>, vector<1x4x64xf32>,
    %cst_9 = arith.constant dense<0.000000e+00> : vector<4xf32>
    %18 = vector.multi_reduction <add>, %14, %cst_9 [1] : vector<4x64xf32> to vector<4xf32>
    %19 = vector.shape_cast %18 : vector<4xf32> to vector<4x1xf32>
    %20 = arith.mulf %14, %14 : vector<4x64xf32>
    %cst_10 = arith.constant dense<0.000000e+00> : vector<4xf32>
    %21 = vector.multi_reduction <add>, %20, %cst_10 [1] : vector<4x64xf32> to vector<4xf32>
    %22 = vector.shape_cast %21 : vector<4xf32> to vector<4x1xf32>
    %23 = tpu.concatenate %19, %22 in 1 : vector<4x1xf32>, vector<4x1xf32> -> vector<4x2xf32>
    %c0_11 = arith.constant 0 : index
    %c0_12 = arith.constant 0 : index
    %c0_13 = arith.constant 0 : index
    %c0_14 = arith.constant 0 : index
    %24 = vector.load %arg5[%c0_11, %c0_12, %c0_13, %c0_14] : memref<1x1x4x2xf32, #tpu.memory_space<vmem>>, vector<1x1x4x2xf32>
    %25 = vector.shape_cast %24 : vector<1x1x4x2xf32> to vector<4x2xf32>
    %26 = vector.shape_cast %23 : vector<4x2xf32> to vector<1x1x4x2xf32>
    tpu.vector_store %arg5[%c0_11, %c0_12, %c0_13, %c0_14], %26 {strides = array<i32>} : memref<1x1x4x2xf32, #tpu.memory_space<vmem>>, vector<1x1x4x2xf32>,
    return
  }
  func.func @transform_0(%arg0: i32, %arg1: i32) -> (i32, i32, i32, i32, i32) {
    %c0_i32 = arith.constant 0 : i32
    %c0_i32_0 = arith.constant 0 : i32
    %c0_i32_1 = arith.constant 0 : i32
    %c0_i32_2 = arith.constant 0 : i32
    return %arg0, %arg1, %c0_i32, %c0_i32_0, %c0_i32_1 : i32, i32, i32, i32, i32
  }
  func.func @transform_1(%arg0: i32, %arg1: i32) -> (i32, i32) {
    %c0_i32 = arith.constant 0 : i32
    %c0_i32_0 = arith.constant 0 : i32
    %c0_i32_1 = arith.constant 0 : i32
    return %c0_i32, %c0_i32_0 : i32, i32
  }
  func.func @transform_2(%arg0: i32, %arg1: i32) -> (i32, i32, i32) {
    %c0_i32 = arith.constant 0 : i32
    %c0_i32_0 = arith.constant 0 : i32
    return %arg0, %c0_i32, %arg1 : i32, i32, i32
  }
  func.func @transform_3(%arg0: i32, %arg1: i32) -> (i32, i32, i32, i32) {
    %c0_i32 = arith.constant 0 : i32
    %c0_i32_0 = arith.constant 0 : i32
    %c0_i32_1 = arith.constant 0 : i32
    return %arg0, %arg1, %c0_i32, %c0_i32_0 : i32, i32, i32, i32
  }
}

module attributes {stable_mosaic.version = 11 : i64} {
  func.func @bn_lrelu_kernel(%arg0: i32, %arg1: i32, %arg2: memref<1x4x64xf32, #tpu.memory_space<vmem>>, %arg3: memref<4x2xf32, #tpu.memory_space<vmem>>, %arg4: memref<1x4x64xf32, #tpu.memory_space<vmem>>) attributes {dimension_semantics = [#tpu.dimension_semantics<parallel>, #tpu.dimension_semantics<parallel>], iteration_bounds = array<i64: 2, 1>, scalar_prefetch = 0 : i64, scratch_operands = 0 : i64, tpu.core_type = #tpu.core_type<tc>, window_params = [{transform_indices = @transform_0, window_bounds = array<i64: 1, 4, 64>}, {pipeline_mode = #tpu.pipeline_mode<synchronous>, transform_indices = @transform_1, window_bounds = array<i64: 4, 2>}, {transform_indices = @transform_2, window_bounds = array<i64: 1, 4, 64>}]} {
    %c0 = arith.constant 0 : index
    %c0_0 = arith.constant 0 : index
    %0 = vector.load %arg3[%c0, %c0_0] : memref<4x2xf32, #tpu.memory_space<vmem>>, vector<4x1xf32>
    %c0_1 = arith.constant 0 : index
    %c1 = arith.constant 1 : index
    %1 = vector.load %arg3[%c0_1, %c1] : memref<4x2xf32, #tpu.memory_space<vmem>>, vector<4x1xf32>
    %c0_2 = arith.constant 0 : index
    %c0_3 = arith.constant 0 : index
    %c0_4 = arith.constant 0 : index
    %2 = vector.load %arg2[%c0_2, %c0_3, %c0_4] : memref<1x4x64xf32, #tpu.memory_space<vmem>>, vector<1x4x64xf32>
    %3 = vector.shape_cast %2 : vector<1x4x64xf32> to vector<4x64xf32>
    %4 = vector.broadcast %0 : vector<4x1xf32> to vector<4x64xf32>
    %5 = arith.mulf %3, %4 : vector<4x64xf32>
    %6 = vector.broadcast %1 : vector<4x1xf32> to vector<4x64xf32>
    %7 = arith.addf %5, %6 : vector<4x64xf32>
    %cst = arith.constant 0.000000e+00 : f32
    %8 = vector.broadcast %cst : f32 to vector<4x64xf32>
    %9 = arith.cmpf ogt, %7, %8 : vector<4x64xf32>
    %cst_5 = arith.constant 0.00999999977 : f32
    %10 = vector.broadcast %cst_5 : f32 to vector<4x64xf32>
    %11 = arith.mulf %10, %7 : vector<4x64xf32>
    %12 = arith.select %9, %7, %11 : vector<4x64xi1>, vector<4x64xf32>
    %c0_6 = arith.constant 0 : index
    %c0_7 = arith.constant 0 : index
    %c0_8 = arith.constant 0 : index
    %13 = vector.load %arg4[%c0_6, %c0_7, %c0_8] : memref<1x4x64xf32, #tpu.memory_space<vmem>>, vector<1x4x64xf32>
    %14 = vector.shape_cast %13 : vector<1x4x64xf32> to vector<4x64xf32>
    %15 = vector.shape_cast %12 : vector<4x64xf32> to vector<1x4x64xf32>
    tpu.vector_store %arg4[%c0_6, %c0_7, %c0_8], %15 {strides = array<i32>} : memref<1x4x64xf32, #tpu.memory_space<vmem>>, vector<1x4x64xf32>,
    return
  }
  func.func @transform_0(%arg0: i32, %arg1: i32) -> (i32, i32, i32) {
    %c0_i32 = arith.constant 0 : i32
    %c0_i32_0 = arith.constant 0 : i32
    return %arg0, %c0_i32, %arg1 : i32, i32, i32
  }
  func.func @transform_1(%arg0: i32, %arg1: i32) -> (i32, i32) {
    %c0_i32 = arith.constant 0 : i32
    %c0_i32_0 = arith.constant 0 : i32
    %c0_i32_1 = arith.constant 0 : i32
    return %c0_i32, %c0_i32_0 : i32, i32
  }
  func.func @transform_2(%arg0: i32, %arg1: i32) -> (i32, i32, i32) {
    %c0_i32 = arith.constant 0 : i32
    %c0_i32_0 = arith.constant 0 : i32
    return %arg0, %c0_i32, %arg1 : i32, i32, i32
  }
}

</mosaic_0001>

<llo_original>
// kernel: _downsample.3
$region0: #{_downsample.3}
  #allocation0 [shape = 'u32[]', space=smem, size = 0x4, offset = 0x4, fixed_abs, tag = 'smem constant byte address 0x4 - core index']
  #allocation1 [shape = 'u32[144,128]{1,0:T(1,128)}', space=vmem, size = 0x12000, scoped, tag = 'internal scratch']
  %s0 = inlined_call_operand.vmem [shape: f32[2,4,64], index: 0, kind: input, shape index: {}, may-alias: {0,2}]
  %s1 = inlined_call_operand.vmem [shape: f32[4,2], index: 1, kind: input, shape index: {}]
  %s2 = inlined_call_operand.vmem [shape: f32[2,4,64], index: 2, kind: output, shape index: {}, may-alias: {0,2}]
  %s3 = sld [smem:[#allocation0]]
  $region41: #{_downsample.3} parent=0
    _
  %s5 = ssub.s32 1, %s3
  %s6 = scalar_select 0, %s5, %s3
  loop: start=0, step=1, limit=4
  $region2: #{_downsample.3} parent=0 // loop_pre_header
    _
  $region3: #{_downsample.3} parent=0 // loop_header
    %s8 = sphi 0, %s12
    %p9 = scmp.ge.s32.totalorder %s8, 4
    %s15 = sphi 0, %s27
    %s16 = sphi 0, %s23
    %s17 = sphi 0, %s15
    %s18 = sphi 0, %s16
    %s19 = sphi 0, %s17
    %s20 = sphi 0, %s18
    %s32 = sphi 0, %s34
    %s35 = sphi 0, %s32
    %s36 = sphi 0, %s35
    %s52 = sphi 0, %s36
    %s56 = sphi 0, %s56
    %s58 = sphi 0, %s56
    %s59 = sphi 0, %s58
    %s73 = sphi 0, %s59
    %s81 = sphi 0, %s83
    %s84 = sphi 0, %s81
    %s85 = sphi 0, %s84
    %s101 = sphi 0, %s85
  $region4: #{_downsample.3} parent=0 // loop_header_branch
    %11 = sbr.rel (%p9) target = $region8
  $region5: #{_downsample.3} parent=0 // loop_body
    %s13 = ssub.s32 %s8, 1
    %s14 = ssub.s32 %s8, 2
    %s21 = sadd.s32 1, %s16
    %p22 = scmp.ge.s32.totalorder %s21, 1
    %s23 = scalar_select %p22, 0, %s21
    %s24 = sadd.s32 1, %s15
    %s25 = scalar_select %p22, %s24, %s15
    %p26 = scmp.ge.s32.totalorder %s25, 2
    %s27 = scalar_select %p26, 0, %s25
    %s28 = ssub.s32 %s15, %s27
    %s29 = ssub.s32 %s16, %s23
    %s30 = sor.u32 %s28, %s29
    %p31 = scmp.eq.s32.totalorder %s30, 0
    %s33 = sadd.s32 %s32, 1
    %s34 = scalar_select %p31, %s32, %s33
    %p37 = pneg %p31
    %p38 = scmp.eq.s32.totalorder %s8, 1
    %p39 = por %p37, %p38
    %p40 = scmp.ne.s32.totalorder %s32, %s35
    %p41 = scmp.eq.s32.totalorder %s8, 0
    %p42 = por %p40, %p41
    %p43 = scmp.ne.s32.totalorder %s32, %s35
    %p44 = scmp.eq.s32.totalorder %s13, 1
    %p45 = por %p43, %p44
    %p46 = scmp.ne.s32.totalorder %s35, %s36
    %p47 = scmp.eq.s32.totalorder %s13, 0
    %p48 = por %p46, %p47
    %p49 = scmp.ne.s32.totalorder %s35, %s36
    %p50 = scmp.eq.s32.totalorder %s14, 1
    %p51 = por %p49, %p50
    %p53 = scmp.ne.s32.totalorder %s36, %s52
    %p54 = scmp.eq.s32.totalorder %s14, 0
    %p55 = por %p53, %p54
    %s57 = sadd.s32 %s56, 1
    %p60 = scmp.eq.s32.totalorder %s8, 1
    %p61 = scmp.ne.s32.totalorder %s56, %s58
    %p62 = scmp.eq.s32.totalorder %s8, 0
    %p63 = por %p61, %p62
    %p64 = scmp.ne.s32.totalorder %s56, %s58
    %p65 = scmp.eq.s32.totalorder %s13, 1
    %p66 = por %p64, %p65
    %p67 = scmp.ne.s32.totalorder %s58, %s59
    %p68 = scmp.eq.s32.totalorder %s13, 0
    %p69 = por %p67, %p68
    %p70 = scmp.ne.s32.totalorder %s58, %s59
    %p71 = scmp.eq.s32.totalorder %s14, 1
    %p72 = por %p70, %p71
    %p74 = scmp.ne.s32.totalorder %s59, %s73
    %p75 = scmp.eq.s32.totalorder %s14, 0
    %p76 = por %p74, %p75
    %s77 = ssub.s32 %s15, %s27
    %s78 = ssub.s32 %s16, %s23
    %s79 = sor.u32 %s77, %s78
    %p80 = scmp.eq.s32.totalorder %s79, 0
    %s82 = sadd.s32 %s81, 1
    %s83 = scalar_select %p80, %s81, %s82
    %p86 = pneg %p80
    %p87 = scmp.eq.s32.totalorder %s8, 1
    %p88 = por %p86, %p87
    %p89 = scmp.ne.s32.totalorder %s81, %s84
    %p90 = scmp.eq.s32.totalorder %s8, 0
    %p91 = por %p89, %p90
    %p92 = scmp.ne.s32.totalorder %s81, %s84
    %p93 = scmp.eq.s32.totalorder %s13, 1
    %p94 = por %p92, %p93
    %p95 = scmp.ne.s32.totalorder %s84, %s85
    %p96 = scmp.eq.s32.totalorder %s13, 0
    %p97 = por %p95, %p96
    %p98 = scmp.ne.s32.totalorder %s84, %s85
    %p99 = scmp.eq.s32.totalorder %s14, 1
    %p100 = por %p98, %p99
    %p102 = scmp.ne.s32.totalorder %s85, %s101
    %p103 = scmp.eq.s32.totalorder %s14, 0
    %p104 = por %p102, %p103
    %p105 = scmp.le.s32.totalorder 1, %s8
    %p106 = scmp.lt.s32.totalorder %s8, 3
    %p107 = pnand %p105, %p106
    %p108 = pneg %p107
    // Predicated region
    $region9: #{_downsample.3} parent=5 // pred_check
      _
    $region10: #{_downsample.3} parent=5 // pred_check_branch
      %110 = sbr.rel (%p107) target = $region12
    $region11: #{_downsample.3} parent=5 // pred_region
      %s111 = ssub.s32 %s8, 1
      // Predicated region
      $region13: #{_downsample.3} parent=11 // pred_check
        %p112 = pneg %p69
      $region14: #{_downsample.3} parent=11 // pred_check_branch
        %114 = sbr.rel (%p112) target = $region16
      $region15: #{_downsample.3} parent=11 // pred_region
        _
      $region16: #{_downsample.3} parent=11 // pred_fallthru
        _
    $region12: #{_downsample.3} parent=5 // pred_fallthru
      _
    %p115 = scmp.lt.s32.totalorder %s8, 2
    // Predicated region
    $region17: #{_downsample.3} parent=5 // pred_check
      %p116 = pneg %p115
    $region18: #{_downsample.3} parent=5 // pred_check_branch
      %118 = sbr.rel (%p116) target = $region20
    $region19: #{_downsample.3} parent=5 // pred_region
      // Predicated region
      $region21: #{_downsample.3} parent=19 // pred_check
        %p119 = pneg %p42
      $region22: #{_downsample.3} parent=19 // pred_check_branch
        %121 = sbr.rel (%p119) target = $region24
      $region23: #{_downsample.3} parent=19 // pred_region
        %p122 = scmp.lt.s32.totalorder %s15, 1
        %s123 = scalar_select %p122, %s15, 1
        %p124 = scmp.lt.s32.totalorder %s16, 0
        %s125 = scalar_select %p124, %s16, 0
        %s126 = sadd.s32 %s125, %s123
        %s127 = smul.addr %s126, 4
        %s128 = scalar_lea.vmem %s0, %s127
      $region24: #{_downsample.3} parent=19 // pred_fallthru
        _
    $region20: #{_downsample.3} parent=5 // pred_fallthru
      _
    %p129 = scmp.le.s32.totalorder 1, %s8
    %p130 = scmp.lt.s32.totalorder %s8, 3
    %p131 = pnand %p129, %p130
    %p132 = pneg %p131
    // Predicated region
    $region25: #{_downsample.3} parent=5 // pred_check
      _
    $region26: #{_downsample.3} parent=5 // pred_check_branch
      %134 = sbr.rel (%p131) target = $region28
    $region27: #{_downsample.3} parent=5 // pred_region
      %s135 = ssub.s32 %s8, 1
      %p136 = scmp.lt.s32.totalorder %s17, 1
      %s137 = scalar_select %p136, %s17, 1
      %p138 = scmp.lt.s32.totalorder %s18, 0
      %s139 = scalar_select %p138, %s18, 0
      %s140 = sadd.s32 %s139, %s137
      %s141 = smul.addr %s140, 4
      %s142 = scalar_lea.vmem %s0, %s141
      %p143 = pneg %p48
      %p144 = pneg %p45
      %p145 = pneg %p69
      %p146 = pneg %p66
      %p147 = pneg %p97
      %p148 = pneg %p94
      %p149 = scmp.lt.s32.totalorder %s17, 1
      %s150 = scalar_select %p149, %s17, 1
      %p151 = scmp.lt.s32.totalorder %s18, 0
      %s152 = scalar_select %p151, %s18, 0
      %s153 = sadd.s32 %s152, %s150
      %s154 = smul.addr %s153, 4
      %s155 = scalar_lea.vmem %s2, %s154
      %p156 = scmp.lt.s32.totalorder %s17, 1
      %s157 = scalar_select %p156, %s17, 1
      %p158 = scmp.lt.s32.totalorder %s18, 0
      %s159 = scalar_select %p158, %s18, 0
      %s160 = sadd.s32 %s159, %s157
      %s161 = smul.addr %s160, 4
      %s162 = scalar_lea.vmem %s0, %s161
      %p163 = scmp.lt.s32.totalorder %s17, 1
      %s164 = scalar_select %p163, %s17, 1
      %p165 = scmp.lt.s32.totalorder %s18, 0
      %s166 = scalar_select %p165, %s18, 0
      %s167 = sadd.s32 %s166, %s164
      %s168 = smul.addr %s167, 4
      %s169 = scalar_lea.vmem %s2, %s168
      %v170 = vld [vmem:[%s1] sm:$0xf]
      %v171 = vld [vmem:[%s162] sm:$0xf]
      %173 = vset.pattern.permute.xlu0 0
      %174 = vperm.xlu0 %173, %v170
      %v175 = vpop.permute.xlu0 %174
      %v177 = vmul.f32 %v171, %v175
      %178 = vset.pattern.permute.xlu0 1
      %179 = vperm.xlu0 %178, %v170
      %v180 = vpop.permute.xlu0 %179
      %v182 = vadd.f32 %v177, %v180
      %vm183 = vcmp.gt.f32.partialorder %v182, 0.0
      %v184 = vmul.f32 %v182, 0.01
      %v185 = vsel %vm183, %v182, %v184
      %vm186 = vcmask 519168
      %187 = vst.msk [vmem:[%s169] sm:$0xf] %vm186, %v185
      %p188 = scmp.lt.s32.totalorder %s17, 1
      %s189 = scalar_select %p188, %s17, 1
      %p190 = scmp.lt.s32.totalorder %s18, 0
      %s191 = scalar_select %p190, %s18, 0
      %s192 = sadd.s32 %s191, %s189
      %s193 = smul.addr %s192, 4
      %s194 = scalar_lea.vmem %s2, %s193
      // Predicated region
      $region29: #{_downsample.3} parent=27 // pred_check
        %p195 = pneg %p94
      $region30: #{_downsample.3} parent=27 // pred_check_branch
        %197 = sbr.rel (%p195) target = $region32
      $region31: #{_downsample.3} parent=27 // pred_region
        _
      $region32: #{_downsample.3} parent=27 // pred_fallthru
        _
    $region28: #{_downsample.3} parent=5 // pred_fallthru
      _
    %p198 = scmp.le.s32.totalorder 2, %s8
    // Predicated region
    $region33: #{_downsample.3} parent=5 // pred_check
      %p199 = pneg %p198
    $region34: #{_downsample.3} parent=5 // pred_check_branch
      %201 = sbr.rel (%p199) target = $region36
    $region35: #{_downsample.3} parent=5 // pred_region
      %s202 = ssub.s32 %s8, 2
      // Predicated region
      $region37: #{_downsample.3} parent=35 // pred_check
        %p203 = pneg %p100
      $region38: #{_downsample.3} parent=35 // pred_check_branch
        %205 = sbr.rel (%p203) target = $region40
      $region39: #{_downsample.3} parent=35 // pred_region
        %p206 = scmp.lt.s32.totalorder %s19, 1
        %s207 = scalar_select %p206, %s19, 1
        %p208 = scmp.lt.s32.totalorder %s20, 0
        %s209 = scalar_select %p208, %s20, 0
        %s210 = sadd.s32 %s209, %s207
        %s211 = smul.addr %s210, 4
        %s212 = scalar_lea.vmem %s2, %s211
      $region40: #{_downsample.3} parent=35 // pred_fallthru
        _
    $region36: #{_downsample.3} parent=5 // pred_fallthru
      _
  $region6: #{_downsample.3} parent=0 // loop_footer
    %s12 = sadd.s32 1, %s8
  $region7: #{_downsample.3} parent=0 // loop_footer_branch
    %7 = sbr.rel target = $region3
  $region8: #{_downsample.3} parent=0 // loop_exit
    _

// kernel: _downsample.2
$region0: #{_downsample.2}
  #allocation0 [shape = 'u32[]', space=smem, size = 0x4, offset = 0x4, fixed_abs, tag = 'smem constant byte address 0x4 - core index']
  #allocation1 [shape = 'u32[144,128]{1,0:T(1,128)}', space=vmem, size = 0x12000, scoped, tag = 'internal scratch']
  %s0 = inlined_call_operand.vmem [shape: f32[2,1,24,9,8], index: 0, kind: input, shape index: {}]
  %s1 = inlined_call_operand.vmem [shape: f32[4,36], index: 1, kind: input, shape index: {}]
  %s2 = inlined_call_operand.vmem [shape: f32[2,4,64], index: 2, kind: output, shape index: {0}]
  %s3 = inlined_call_operand.vmem [shape: f32[2,1,4,2], index: 3, kind: output, shape index: {1}]
  %4 = xla_tuple %s2, %s3
  %s5 = sld [smem:[#allocation0]]
  $region49: #{_downsample.2} parent=0
    _
  %s7 = ssub.s32 1, %s5
  %s8 = scalar_select 0, %s7, %s5
  loop: start=0, step=1, limit=4
  $region2: #{_downsample.2} parent=0 // loop_pre_header
    _
  $region3: #{_downsample.2} parent=0 // loop_header
    %s10 = sphi 0, %s14
    %p11 = scmp.ge.s32.totalorder %s10, 4
    %s17 = sphi 0, %s29
    %s18 = sphi 0, %s25
    %s19 = sphi 0, %s17
    %s20 = sphi 0, %s18
    %s21 = sphi 0, %s19
    %s22 = sphi 0, %s20
    %s34 = sphi 0, %s36
    %s37 = sphi 0, %s34
    %s38 = sphi 0, %s37
    %s54 = sphi 0, %s38
    %s58 = sphi 0, %s58
    %s60 = sphi 0, %s58
    %s61 = sphi 0, %s60
    %s75 = sphi 0, %s61
    %s83 = sphi 0, %s85
    %s86 = sphi 0, %s83
    %s87 = sphi 0, %s86
    %s103 = sphi 0, %s87
    %s111 = sphi 0, %s113
    %s114 = sphi 0, %s111
    %s115 = sphi 0, %s114
    %s131 = sphi 0, %s115
  $region4: #{_downsample.2} parent=0 // loop_header_branch
    %13 = sbr.rel (%p11) target = $region8
  $region5: #{_downsample.2} parent=0 // loop_body
    %s15 = ssub.s32 %s10, 1
    %s16 = ssub.s32 %s10, 2
    %s23 = sadd.s32 1, %s18
    %p24 = scmp.ge.s32.totalorder %s23, 1
    %s25 = scalar_select %p24, 0, %s23
    %s26 = sadd.s32 1, %s17
    %s27 = scalar_select %p24, %s26, %s17
    %p28 = scmp.ge.s32.totalorder %s27, 2
    %s29 = scalar_select %p28, 0, %s27
    %s30 = ssub.s32 %s17, %s29
    %s31 = ssub.s32 %s18, %s25
    %s32 = sor.u32 %s30, %s31
    %p33 = scmp.eq.s32.totalorder %s32, 0
    %s35 = sadd.s32 %s34, 1
    %s36 = scalar_select %p33, %s34, %s35
    %p39 = pneg %p33
    %p40 = scmp.eq.s32.totalorder %s10, 1
    %p41 = por %p39, %p40
    %p42 = scmp.ne.s32.totalorder %s34, %s37
    %p43 = scmp.eq.s32.totalorder %s10, 0
    %p44 = por %p42, %p43
    %p45 = scmp.ne.s32.totalorder %s34, %s37
    %p46 = scmp.eq.s32.totalorder %s15, 1
    %p47 = por %p45, %p46
    %p48 = scmp.ne.s32.totalorder %s37, %s38
    %p49 = scmp.eq.s32.totalorder %s15, 0
    %p50 = por %p48, %p49
    %p51 = scmp.ne.s32.totalorder %s37, %s38
    %p52 = scmp.eq.s32.totalorder %s16, 1
    %p53 = por %p51, %p52
    %p55 = scmp.ne.s32.totalorder %s38, %s54
    %p56 = scmp.eq.s32.totalorder %s16, 0
    %p57 = por %p55, %p56
    %s59 = sadd.s32 %s58, 1
    %p62 = scmp.eq.s32.totalorder %s10, 1
    %p63 = scmp.ne.s32.totalorder %s58, %s60
    %p64 = scmp.eq.s32.totalorder %s10, 0
    %p65 = por %p63, %p64
    %p66 = scmp.ne.s32.totalorder %s58, %s60
    %p67 = scmp.eq.s32.totalorder %s15, 1
    %p68 = por %p66, %p67
    %p69 = scmp.ne.s32.totalorder %s60, %s61
    %p70 = scmp.eq.s32.totalorder %s15, 0
    %p71 = por %p69, %p70
    %p72 = scmp.ne.s32.totalorder %s60, %s61
    %p73 = scmp.eq.s32.totalorder %s16, 1
    %p74 = por %p72, %p73
    %p76 = scmp.ne.s32.totalorder %s61, %s75
    %p77 = scmp.eq.s32.totalorder %s16, 0
    %p78 = por %p76, %p77
    %s79 = ssub.s32 %s17, %s29
    %s80 = ssub.s32 %s18, %s25
    %s81 = sor.u32 %s79, %s80
    %p82 = scmp.eq.s32.totalorder %s81, 0
    %s84 = sadd.s32 %s83, 1
    %s85 = scalar_select %p82, %s83, %s84
    %p88 = pneg %p82
    %p89 = scmp.eq.s32.totalorder %s10, 1
    %p90 = por %p88, %p89
    %p91 = scmp.ne.s32.totalorder %s83, %s86
    %p92 = scmp.eq.s32.totalorder %s10, 0
    %p93 = por %p91, %p92
    %p94 = scmp.ne.s32.totalorder %s83, %s86
    %p95 = scmp.eq.s32.totalorder %s15, 1
    %p96 = por %p94, %p95
    %p97 = scmp.ne.s32.totalorder %s86, %s87
    %p98 = scmp.eq.s32.totalorder %s15, 0
    %p99 = por %p97, %p98
    %p100 = scmp.ne.s32.totalorder %s86, %s87
    %p101 = scmp.eq.s32.totalorder %s16, 1
    %p102 = por %p100, %p101
    %p104 = scmp.ne.s32.totalorder %s87, %s103
    %p105 = scmp.eq.s32.totalorder %s16, 0
    %p106 = por %p104, %p105
    %s107 = ssub.s32 %s17, %s29
    %s108 = ssub.s32 %s18, %s25
    %s109 = sor.u32 %s107, %s108
    %p110 = scmp.eq.s32.totalorder %s109, 0
    %s112 = sadd.s32 %s111, 1
    %s113 = scalar_select %p110, %s111, %s112
    %p116 = pneg %p110
    %p117 = scmp.eq.s32.totalorder %s10, 1
    %p118 = por %p116, %p117
    %p119 = scmp.ne.s32.totalorder %s111, %s114
    %p120 = scmp.eq.s32.totalorder %s10, 0
    %p121 = por %p119, %p120
    %p122 = scmp.ne.s32.totalorder %s111, %s114
    %p123 = scmp.eq.s32.totalorder %s15, 1
    %p124 = por %p122, %p123
    %p125 = scmp.ne.s32.totalorder %s114, %s115
    %p126 = scmp.eq.s32.totalorder %s15, 0
    %p127 = por %p125, %p126
    %p128 = scmp.ne.s32.totalorder %s114, %s115
    %p129 = scmp.eq.s32.totalorder %s16, 1
    %p130 = por %p128, %p129
    %p132 = scmp.ne.s32.totalorder %s115, %s131
    %p133 = scmp.eq.s32.totalorder %s16, 0
    %p134 = por %p132, %p133
    %p135 = scmp.le.s32.totalorder 1, %s10
    %p136 = scmp.lt.s32.totalorder %s10, 3
    %p137 = pnand %p135, %p136
    %p138 = pneg %p137
    // Predicated region
    $region9: #{_downsample.2} parent=5 // pred_check
      _
    $region10: #{_downsample.2} parent=5 // pred_check_branch
      %140 = sbr.rel (%p137) target = $region12
    $region11: #{_downsample.2} parent=5 // pred_region
      %s141 = ssub.s32 %s10, 1
      // Predicated region
      $region13: #{_downsample.2} parent=11 // pred_check
        %p142 = pneg %p71
      $region14: #{_downsample.2} parent=11 // pred_check_branch
        %144 = sbr.rel (%p142) target = $region16
      $region15: #{_downsample.2} parent=11 // pred_region
        _
      $region16: #{_downsample.2} parent=11 // pred_fallthru
        _
    $region12: #{_downsample.2} parent=5 // pred_fallthru
      _
    %p145 = scmp.lt.s32.totalorder %s10, 2
    // Predicated region
    $region17: #{_downsample.2} parent=5 // pred_check
      %p146 = pneg %p145
    $region18: #{_downsample.2} parent=5 // pred_check_branch
      %148 = sbr.rel (%p146) target = $region20
    $region19: #{_downsample.2} parent=5 // pred_region
      // Predicated region
      $region21: #{_downsample.2} parent=19 // pred_check
        %p149 = pneg %p44
      $region22: #{_downsample.2} parent=19 // pred_check_branch
        %151 = sbr.rel (%p149) target = $region24
      $region23: #{_downsample.2} parent=19 // pred_region
        %p152 = scmp.lt.s32.totalorder %s17, 1
        %s153 = scalar_select %p152, %s17, 1
        %p154 = scmp.lt.s32.totalorder %s18, 0
        %s155 = scalar_select %p154, %s18, 0
        %s156 = smul.addr %s155, 48
        %s157 = smul.addr %s153, 48
        %s158 = sadd.s32 %s156, %s157
        %s159 = smul.addr %s158, 8
        %s160 = scalar_lea.vmem %s0, %s159
      $region24: #{_downsample.2} parent=19 // pred_fallthru
        _
    $region20: #{_downsample.2} parent=5 // pred_fallthru
      _
    %p161 = scmp.le.s32.totalorder 1, %s10
    %p162 = scmp.lt.s32.totalorder %s10, 3
    %p163 = pnand %p161, %p162
    %p164 = pneg %p163
    // Predicated region
    $region25: #{_downsample.2} parent=5 // pred_check
      _
    $region26: #{_downsample.2} parent=5 // pred_check_branch
      %166 = sbr.rel (%p163) target = $region28
    $region27: #{_downsample.2} parent=5 // pred_region
      %s167 = ssub.s32 %s10, 1
      %p168 = scmp.lt.s32.totalorder %s19, 1
      %s169 = scalar_select %p168, %s19, 1
      %p170 = scmp.lt.s32.totalorder %s20, 0
      %s171 = scalar_select %p170, %s20, 0
      %s172 = smul.addr %s171, 48
      %s173 = smul.addr %s169, 48
      %s174 = sadd.s32 %s172, %s173
      %s175 = smul.addr %s174, 8
      %s176 = scalar_lea.vmem %s0, %s175
      %p177 = pneg %p50
      %p178 = pneg %p47
      %p179 = pneg %p71
      %p180 = pneg %p68
      %p181 = pneg %p99
      %p182 = pneg %p96
      %p183 = scmp.lt.s32.totalorder %s19, 1
      %s184 = scalar_select %p183, %s19, 1
      %p185 = scmp.lt.s32.totalorder %s20, 0
      %s186 = scalar_select %p185, %s20, 0
      %s187 = sadd.s32 %s186, %s184
      %s188 = smul.addr %s187, 4
      %s189 = scalar_lea.vmem %s2, %s188
      %p190 = pneg %p127
      %p191 = pneg %p124
      %p192 = scmp.lt.s32.totalorder %s19, 1
      %s193 = scalar_select %p192, %s19, 1
      %p194 = scmp.lt.s32.totalorder %s20, 0
      %s195 = scalar_select %p194, %s20, 0
      %s196 = sadd.s32 %s195, %s193
      %s197 = smul.addr %s196, 4
      %s198 = scalar_lea.vmem %s3, %s197
      %p199 = scmp.lt.s32.totalorder %s19, 1
      %s200 = scalar_select %p199, %s19, 1
      %p201 = scmp.lt.s32.totalorder %s20, 0
      %s202 = scalar_select %p201, %s20, 0
      %s203 = smul.addr %s202, 48
      %s204 = smul.addr %s200, 48
      %s205 = sadd.s32 %s203, %s204
      %s206 = smul.addr %s205, 8
      %s207 = scalar_lea.vmem %s0, %s206
      %p208 = scmp.lt.s32.totalorder %s19, 1
      %s209 = scalar_select %p208, %s19, 1
      %p210 = scmp.lt.s32.totalorder %s20, 0
      %s211 = scalar_select %p210, %s20, 0
      %s212 = sadd.s32 %s211, %s209
      %s213 = smul.addr %s212, 4
      %s214 = scalar_lea.vmem %s2, %s213
      %p215 = scmp.lt.s32.totalorder %s19, 1
      %s216 = scalar_select %p215, %s19, 1
      %p217 = scmp.lt.s32.totalorder %s20, 0
      %s218 = scalar_select %p217, %s20, 0
      %s219 = sadd.s32 %s218, %s216
      %s220 = smul.addr %s219, 4
      %s221 = scalar_lea.vmem %s3, %s220
      %v222 = vld [vmem:[%s207] sm:$0xff]
      %v223 = vld [vmem:[%s207 + $0x8] sm:$0x1]
      %v224 = vld [vmem:[%s207 + $0x10] sm:$0xff]
      %v225 = vld [vmem:[%s207 + $0x18] sm:$0x1]
      %v226 = vld [vmem:[%s207 + $0x20] sm:$0xff]
      %v227 = vld [vmem:[%s207 + $0x28] sm:$0x1]
      %v228 = vld [vmem:[%s207 + $0x30] sm:$0xff]
      %v229 = vld [vmem:[%s207 + $0x38] sm:$0x1]
      %v230 = vld [vmem:[%s207 + $0x40] sm:$0xff]
      %v231 = vld [vmem:[%s207 + $0x48] sm:$0x1]
      %v232 = vld [vmem:[%s207 + $0x50] sm:$0xff]
      %v233 = vld [vmem:[%s207 + $0x58] sm:$0x1]
      %v234 = vld [vmem:[%s207 + $0x60] sm:$0xff]
      %v235 = vld [vmem:[%s207 + $0x68] sm:$0x1]
      %v236 = vld [vmem:[%s207 + $0x70] sm:$0xff]
      %v237 = vld [vmem:[%s207 + $0x78] sm:$0x1]
      %v238 = vld [vmem:[%s207 + $0x80] sm:$0xff]
      %v239 = vld [vmem:[%s207 + $0x88] sm:$0x1]
      %v240 = vld [vmem:[%s207 + $0x90] sm:$0xff]
      %v241 = vld [vmem:[%s207 + $0x98] sm:$0x1]
      %v242 = vld [vmem:[%s207 + $0xa0] sm:$0xff]
      %v243 = vld [vmem:[%s207 + $0xa8] sm:$0x1]
      %v244 = vld [vmem:[%s207 + $0xb0] sm:$0xff]
      %v245 = vld [vmem:[%s207 + $0xb8] sm:$0x1]
      %v246 = vld [vmem:[%s207 + $0xc0] sm:$0xff]
      %v247 = vld [vmem:[%s207 + $0xd0] sm:$0xff]
      %v248 = vld [vmem:[%s207 + $0xe0] sm:$0xff]
      %v249 = vld [vmem:[%s207 + $0xf0] sm:$0xff]
      %v250 = vld [vmem:[%s207 + $0x100] sm:$0xff]
      %v251 = vld [vmem:[%s207 + $0x110] sm:$0xff]
      %v252 = vld [vmem:[%s207 + $0x120] sm:$0xff]
      %v253 = vld [vmem:[%s207 + $0x130] sm:$0xff]
      %v254 = vld [vmem:[%s207 + $0x140] sm:$0xff]
      %v255 = vld [vmem:[%s207 + $0x150] sm:$0xff]
      %v256 = vld [vmem:[%s207 + $0x160] sm:$0xff]
      %v257 = vld [vmem:[%s207 + $0x170] sm:$0xff]
      %vm266 = vcmask 1046528
      %v267 = vrot.slane %v222, 1
      %v268 = vrot.slane %v223, 1
      %v269 = vsel %vm266, %v267, %v268
      %v270 = vrot.slane %v224, 1
      %v271 = vrot.slane %v225, 1
      %v272 = vsel %vm266, %v270, %v271
      %v273 = vrot.slane %v226, 1
      %v274 = vrot.slane %v227, 1
      %v275 = vsel %vm266, %v273, %v274
      %v276 = vrot.slane %v228, 1
      %v277 = vrot.slane %v229, 1
      %v278 = vsel %vm266, %v276, %v277
      %v291 = vrot.slane %v230, 1
      %v292 = vrot.slane %v231, 1
      %v293 = vsel %vm266, %v291, %v292
      %v294 = vrot.slane %v232, 1
      %v295 = vrot.slane %v233, 1
      %v296 = vsel %vm266, %v294, %v295
      %v297 = vrot.slane %v234, 1
      %v298 = vrot.slane %v235, 1
      %v299 = vsel %vm266, %v297, %v298
      %v300 = vrot.slane %v236, 1
      %v301 = vrot.slane %v237, 1
      %v302 = vsel %vm266, %v300, %v301
      %v315 = vrot.slane %v238, 1
      %v316 = vrot.slane %v239, 1
      %v317 = vsel %vm266, %v315, %v316
      %v318 = vrot.slane %v240, 1
      %v319 = vrot.slane %v241, 1
      %v320 = vsel %vm266, %v318, %v319
      %v321 = vrot.slane %v242, 1
      %v322 = vrot.slane %v243, 1
      %v323 = vsel %vm266, %v321, %v322
      %v324 = vrot.slane %v244, 1
      %v325 = vrot.slane %v245, 1
      %v326 = vsel %vm266, %v324, %v325
      %v331 = vcombine.low %v222, %v226
      %v332 = vcombine.high %v222, %v226
      %v334 = vunpack.c.l.s4 1983009808
      %v335 = vunpack.c.0.s8 %v334
      %v336 = vlaneseq
      %v337 = vshrl.u32 %v336, 7
      %v338 = vsub.s32 %v335, %v337
      %v339 = vrot.slane %v331, %v338
      %v341 = vunpack.c.l.s4 1983009808
      %v342 = vunpack.c.0.s8 %v341
      %v343 = vlaneseq
      %v344 = vshrl.u32 %v343, 7
      %v345 = vsub.s32 %v342, %v344
      %v346 = vrot.slane %v332, %v345
      %v347 = vcombine.low %v224, %v228
      %v348 = vcombine.high %v224, %v228
      %v350 = vunpack.c.l.s4 1983009808
      %v351 = vunpack.c.0.s8 %v350
      %v352 = vlaneseq
      %v353 = vshrl.u32 %v352, 7
      %v354 = vsub.s32 %v351, %v353
      %v355 = vrot.slane %v347, %v354
      %v357 = vunpack.c.l.s4 1983009808
      %v358 = vunpack.c.0.s8 %v357
      %v359 = vlaneseq
      %v360 = vshrl.u32 %v359, 7
      %v361 = vsub.s32 %v358, %v360
      %v362 = vrot.slane %v348, %v361
      %v363 = vcombine.low %v230, %v234
      %v364 = vcombine.high %v230, %v234
      %v366 = vunpack.c.l.s4 1983009808
      %v367 = vunpack.c.0.s8 %v366
      %v368 = vlaneseq
      %v369 = vshrl.u32 %v368, 7
      %v370 = vsub.s32 %v367, %v369
      %v371 = vrot.slane %v363, %v370
      %v373 = vunpack.c.l.s4 1983009808
      %v374 = vunpack.c.0.s8 %v373
      %v375 = vlaneseq
      %v376 = vshrl.u32 %v375, 7
      %v377 = vsub.s32 %v374, %v376
      %v378 = vrot.slane %v364, %v377
      %v379 = vcombine.low %v232, %v236
      %v380 = vcombine.high %v232, %v236
      %v382 = vunpack.c.l.s4 1983009808
      %v383 = vunpack.c.0.s8 %v382
      %v384 = vlaneseq
      %v385 = vshrl.u32 %v384, 7
      %v386 = vsub.s32 %v383, %v385
      %v387 = vrot.slane %v379, %v386
      %v389 = vunpack.c.l.s4 1983009808
      %v390 = vunpack.c.0.s8 %v389
      %v391 = vlaneseq
      %v392 = vshrl.u32 %v391, 7
      %v393 = vsub.s32 %v390, %v392
      %v394 = vrot.slane %v380, %v393
      %v395 = vcombine.low %v339, %v355
      %v396 = vcombine.high %v339, %v355
      %v398 = vunpack.c.l.s4 1934713408
      %v399 = vunpack.c.0.s8 %v398
      %v400 = vlaneseq
      %v401 = vshrl.u32 %v400, 7
      %v402 = vsub.s32 %v399, %v401
      %v403 = vrot.slane %v395, %v402
      %v405 = vunpack.c.l.s4 1934713408
      %v406 = vunpack.c.0.s8 %v405
      %v407 = vlaneseq
      %v408 = vshrl.u32 %v407, 7
      %v409 = vsub.s32 %v406, %v408
      %v410 = vrot.slane %v396, %v409
      %v411 = vcombine.low %v346, %v362
      %v412 = vcombine.high %v346, %v362
      %v414 = vunpack.c.l.s4 1934713408
      %v415 = vunpack.c.0.s8 %v414
      %v416 = vlaneseq
      %v417 = vshrl.u32 %v416, 7
      %v418 = vsub.s32 %v415, %v417
      %v419 = vrot.slane %v411, %v418
      %v421 = vunpack.c.l.s4 1934713408
      %v422 = vunpack.c.0.s8 %v421
      %v423 = vlaneseq
      %v424 = vshrl.u32 %v423, 7
      %v425 = vsub.s32 %v422, %v424
      %v426 = vrot.slane %v412, %v425
      %v427 = vcombine.low %v371, %v387
      %v428 = vcombine.high %v371, %v387
      %v430 = vunpack.c.l.s4 1934713408
      %v431 = vunpack.c.0.s8 %v430
      %v432 = vlaneseq
      %v433 = vshrl.u32 %v432, 7
      %v434 = vsub.s32 %v431, %v433
      %v435 = vrot.slane %v427, %v434
      %v437 = vunpack.c.l.s4 1934713408
      %v438 = vunpack.c.0.s8 %v437
      %v439 = vlaneseq
      %v440 = vshrl.u32 %v439, 7
      %v441 = vsub.s32 %v438, %v440
      %v442 = vrot.slane %v428, %v441
      %v443 = vcombine.low %v378, %v394
      %v444 = vcombine.high %v378, %v394
      %v446 = vunpack.c.l.s4 1934713408
      %v447 = vunpack.c.0.s8 %v446
      %v448 = vlaneseq
      %v449 = vshrl.u32 %v448, 7
      %v450 = vsub.s32 %v447, %v449
      %v451 = vrot.slane %v443, %v450
      %v453 = vunpack.c.l.s4 1934713408
      %v454 = vunpack.c.0.s8 %v453
      %v455 = vlaneseq
      %v456 = vshrl.u32 %v455, 7
      %v457 = vsub.s32 %v454, %v456
      %v458 = vrot.slane %v444, %v457
      %v459 = vcombine.low %v403, %v435
      %v460 = vcombine.high %v403, %v435
      %v461 = vcombine.low %v410, %v442
      %v462 = vcombine.high %v410, %v442
      %v463 = vcombine.low %v419, %v451
      %v464 = vcombine.high %v419, %v451
      %v465 = vcombine.low %v426, %v458
      %v466 = vcombine.high %v426, %v458
      %v467 = vcombine.low %v238, %v242
      %v468 = vcombine.high %v238, %v242
      %v470 = vunpack.c.l.s4 1983009808
      %v471 = vunpack.c.0.s8 %v470
      %v472 = vlaneseq
      %v473 = vshrl.u32 %v472, 7
      %v474 = vsub.s32 %v471, %v473
      %v475 = vrot.slane %v467, %v474
      %v477 = vunpack.c.l.s4 1983009808
      %v478 = vunpack.c.0.s8 %v477
      %v479 = vlaneseq
      %v480 = vshrl.u32 %v479, 7
      %v481 = vsub.s32 %v478, %v480
      %v482 = vrot.slane %v468, %v481
      %v483 = vcombine.low %v240, %v244
      %v484 = vcombine.high %v240, %v244
      %v486 = vunpack.c.l.s4 1983009808
      %v487 = vunpack.c.0.s8 %v486
      %v488 = vlaneseq
      %v489 = vshrl.u32 %v488, 7
      %v490 = vsub.s32 %v487, %v489
      %v491 = vrot.slane %v483, %v490
      %v493 = vunpack.c.l.s4 1983009808
      %v494 = vunpack.c.0.s8 %v493
      %v495 = vlaneseq
      %v496 = vshrl.u32 %v495, 7
      %v497 = vsub.s32 %v494, %v496
      %v498 = vrot.slane %v484, %v497
      %v499 = vcombine.low %v246, %v248
      %v500 = vcombine.high %v246, %v248
      %v502 = vunpack.c.l.s4 1983009808
      %v503 = vunpack.c.0.s8 %v502
      %v504 = vlaneseq
      %v505 = vshrl.u32 %v504, 7
      %v506 = vsub.s32 %v503, %v505
      %v507 = vrot.slane %v499, %v506
      %v509 = vunpack.c.l.s4 1983009808
      %v510 = vunpack.c.0.s8 %v509
      %v511 = vlaneseq
      %v512 = vshrl.u32 %v511, 7
      %v513 = vsub.s32 %v510, %v512
      %v514 = vrot.slane %v500, %v513
      %v515 = vcombine.low %v247, %v249
      %v516 = vcombine.high %v247, %v249
      %v518 = vunpack.c.l.s4 1983009808
      %v519 = vunpack.c.0.s8 %v518
      %v520 = vlaneseq
      %v521 = vshrl.u32 %v520, 7
      %v522 = vsub.s32 %v519, %v521
      %v523 = vrot.slane %v515, %v522
      %v525 = vunpack.c.l.s4 1983009808
      %v526 = vunpack.c.0.s8 %v525
      %v527 = vlaneseq
      %v528 = vshrl.u32 %v527, 7
      %v529 = vsub.s32 %v526, %v528
      %v530 = vrot.slane %v516, %v529
      %v531 = vcombine.low %v475, %v491
      %v532 = vcombine.high %v475, %v491
      %v534 = vunpack.c.l.s4 1934713408
      %v535 = vunpack.c.0.s8 %v534
      %v536 = vlaneseq
      %v537 = vshrl.u32 %v536, 7
      %v538 = vsub.s32 %v535, %v537
      %v539 = vrot.slane %v531, %v538
      %v541 = vunpack.c.l.s4 1934713408
      %v542 = vunpack.c.0.s8 %v541
      %v543 = vlaneseq
      %v544 = vshrl.u32 %v543, 7
      %v545 = vsub.s32 %v542, %v544
      %v546 = vrot.slane %v532, %v545
      %v547 = vcombine.low %v482, %v498
      %v548 = vcombine.high %v482, %v498
      %v550 = vunpack.c.l.s4 1934713408
      %v551 = vunpack.c.0.s8 %v550
      %v552 = vlaneseq
      %v553 = vshrl.u32 %v552, 7
      %v554 = vsub.s32 %v551, %v553
      %v555 = vrot.slane %v547, %v554
      %v557 = vunpack.c.l.s4 1934713408
      %v558 = vunpack.c.0.s8 %v557
      %v559 = vlaneseq
      %v560 = vshrl.u32 %v559, 7
      %v561 = vsub.s32 %v558, %v560
      %v562 = vrot.slane %v548, %v561
      %v563 = vcombine.low %v507, %v523
      %v564 = vcombine.high %v507, %v523
      %v566 = vunpack.c.l.s4 1934713408
      %v567 = vunpack.c.0.s8 %v566
      %v568 = vlaneseq
      %v569 = vshrl.u32 %v568, 7
      %v570 = vsub.s32 %v567, %v569
      %v571 = vrot.slane %v563, %v570
      %v573 = vunpack.c.l.s4 1934713408
      %v574 = vunpack.c.0.s8 %v573
      %v575 = vlaneseq
      %v576 = vshrl.u32 %v575, 7
      %v577 = vsub.s32 %v574, %v576
      %v578 = vrot.slane %v564, %v577
      %v579 = vcombine.low %v514, %v530
      %v580 = vcombine.high %v514, %v530
      %v582 = vunpack.c.l.s4 1934713408
      %v583 = vunpack.c.0.s8 %v582
      %v584 = vlaneseq
      %v585 = vshrl.u32 %v584, 7
      %v586 = vsub.s32 %v583, %v585
      %v587 = vrot.slane %v579, %v586
      %v589 = vunpack.c.l.s4 1934713408
      %v590 = vunpack.c.0.s8 %v589
      %v591 = vlaneseq
      %v592 = vshrl.u32 %v591, 7
      %v593 = vsub.s32 %v590, %v592
      %v594 = vrot.slane %v580, %v593
      %v595 = vcombine.low %v539, %v571
      %v596 = vcombine.high %v539, %v571
      %v597 = vcombine.low %v546, %v578
      %v598 = vcombine.high %v546, %v578
      %v599 = vcombine.low %v555, %v587
      %v600 = vcombine.high %v555, %v587
      %v601 = vcombine.low %v562, %v594
      %v602 = vcombine.high %v562, %v594
      %v603 = vcombine.low %v250, %v252
      %v604 = vcombine.high %v250, %v252
      %v606 = vunpack.c.l.s4 1983009808
      %v607 = vunpack.c.0.s8 %v606
      %v608 = vlaneseq
      %v609 = vshrl.u32 %v608, 7
      %v610 = vsub.s32 %v607, %v609
      %v611 = vrot.slane %v603, %v610
      %v613 = vunpack.c.l.s4 1983009808
      %v614 = vunpack.c.0.s8 %v613
      %v615 = vlaneseq
      %v616 = vshrl.u32 %v615, 7
      %v617 = vsub.s32 %v614, %v616
      %v618 = vrot.slane %v604, %v617
      %v619 = vcombine.low %v251, %v253
      %v620 = vcombine.high %v251, %v253
      %v622 = vunpack.c.l.s4 1983009808
      %v623 = vunpack.c.0.s8 %v622
      %v624 = vlaneseq
      %v625 = vshrl.u32 %v624, 7
      %v626 = vsub.s32 %v623, %v625
      %v627 = vrot.slane %v619, %v626
      %v629 = vunpack.c.l.s4 1983009808
      %v630 = vunpack.c.0.s8 %v629
      %v631 = vlaneseq
      %v632 = vshrl.u32 %v631, 7
      %v633 = vsub.s32 %v630, %v632
      %v634 = vrot.slane %v620, %v633
      %v635 = vcombine.low %v254, %v256
      %v636 = vcombine.high %v254, %v256
      %v638 = vunpack.c.l.s4 1983009808
      %v639 = vunpack.c.0.s8 %v638
      %v640 = vlaneseq
      %v641 = vshrl.u32 %v640, 7
      %v642 = vsub.s32 %v639, %v641
      %v643 = vrot.slane %v635, %v642
      %v645 = vunpack.c.l.s4 1983009808
      %v646 = vunpack.c.0.s8 %v645
      %v647 = vlaneseq
      %v648 = vshrl.u32 %v647, 7
      %v649 = vsub.s32 %v646, %v648
      %v650 = vrot.slane %v636, %v649
      %v651 = vcombine.low %v255, %v257
      %v652 = vcombine.high %v255, %v257
      %v654 = vunpack.c.l.s4 1983009808
      %v655 = vunpack.c.0.s8 %v654
      %v656 = vlaneseq
      %v657 = vshrl.u32 %v656, 7
      %v658 = vsub.s32 %v655, %v657
      %v659 = vrot.slane %v651, %v658
      %v661 = vunpack.c.l.s4 1983009808
      %v662 = vunpack.c.0.s8 %v661
      %v663 = vlaneseq
      %v664 = vshrl.u32 %v663, 7
      %v665 = vsub.s32 %v662, %v664
      %v666 = vrot.slane %v652, %v665
      %v667 = vcombine.low %v611, %v627
      %v668 = vcombine.high %v611, %v627
      %v670 = vunpack.c.l.s4 1934713408
      %v671 = vunpack.c.0.s8 %v670
      %v672 = vlaneseq
      %v673 = vshrl.u32 %v672, 7
      %v674 = vsub.s32 %v671, %v673
      %v675 = vrot.slane %v667, %v674
      %v677 = vunpack.c.l.s4 1934713408
      %v678 = vunpack.c.0.s8 %v677
      %v679 = vlaneseq
      %v680 = vshrl.u32 %v679, 7
      %v681 = vsub.s32 %v678, %v680
      %v682 = vrot.slane %v668, %v681
      %v683 = vcombine.low %v618, %v634
      %v684 = vcombine.high %v618, %v634
      %v686 = vunpack.c.l.s4 1934713408
      %v687 = vunpack.c.0.s8 %v686
      %v688 = vlaneseq
      %v689 = vshrl.u32 %v688, 7
      %v690 = vsub.s32 %v687, %v689
      %v691 = vrot.slane %v683, %v690
      %v693 = vunpack.c.l.s4 1934713408
      %v694 = vunpack.c.0.s8 %v693
      %v695 = vlaneseq
      %v696 = vshrl.u32 %v695, 7
      %v697 = vsub.s32 %v694, %v696
      %v698 = vrot.slane %v684, %v697
      %v699 = vcombine.low %v643, %v659
      %v700 = vcombine.high %v643, %v659
      %v702 = vunpack.c.l.s4 1934713408
      %v703 = vunpack.c.0.s8 %v702
      %v704 = vlaneseq
      %v705 = vshrl.u32 %v704, 7
      %v706 = vsub.s32 %v703, %v705
      %v707 = vrot.slane %v699, %v706
      %v709 = vunpack.c.l.s4 1934713408
      %v710 = vunpack.c.0.s8 %v709
      %v711 = vlaneseq
      %v712 = vshrl.u32 %v711, 7
      %v713 = vsub.s32 %v710, %v712
      %v714 = vrot.slane %v700, %v713
      %v715 = vcombine.low %v650, %v666
      %v716 = vcombine.high %v650, %v666
      %v718 = vunpack.c.l.s4 1934713408
      %v719 = vunpack.c.0.s8 %v718
      %v720 = vlaneseq
      %v721 = vshrl.u32 %v720, 7
      %v722 = vsub.s32 %v719, %v721
      %v723 = vrot.slane %v715, %v722
      %v725 = vunpack.c.l.s4 1934713408
      %v726 = vunpack.c.0.s8 %v725
      %v727 = vlaneseq
      %v728 = vshrl.u32 %v727, 7
      %v729 = vsub.s32 %v726, %v728
      %v730 = vrot.slane %v716, %v729
      %v731 = vcombine.low %v675, %v707
      %v732 = vcombine.high %v675, %v707
      %v733 = vcombine.low %v682, %v714
      %v734 = vcombine.high %v682, %v714
      %v735 = vcombine.low %v691, %v723
      %v736 = vcombine.high %v691, %v723
      %v737 = vcombine.low %v698, %v730
      %v738 = vcombine.high %v698, %v730
      %v739 = vcombine.low %v269, %v275
      %v740 = vcombine.high %v269, %v275
      %v742 = vunpack.c.l.s4 1983009808
      %v743 = vunpack.c.0.s8 %v742
      %v744 = vlaneseq
      %v745 = vshrl.u32 %v744, 7
      %v746 = vsub.s32 %v743, %v745
      %v747 = vrot.slane %v739, %v746
      %v749 = vunpack.c.l.s4 1983009808
      %v750 = vunpack.c.0.s8 %v749
      %v751 = vlaneseq
      %v752 = vshrl.u32 %v751, 7
      %v753 = vsub.s32 %v750, %v752
      %v754 = vrot.slane %v740, %v753
      %v755 = vcombine.low %v272, %v278
      %v756 = vcombine.high %v272, %v278
      %v758 = vunpack.c.l.s4 1983009808
      %v759 = vunpack.c.0.s8 %v758
      %v760 = vlaneseq
      %v761 = vshrl.u32 %v760, 7
      %v762 = vsub.s32 %v759, %v761
      %v763 = vrot.slane %v755, %v762
      %v765 = vunpack.c.l.s4 1983009808
      %v766 = vunpack.c.0.s8 %v765
      %v767 = vlaneseq
      %v768 = vshrl.u32 %v767, 7
      %v769 = vsub.s32 %v766, %v768
      %v770 = vrot.slane %v756, %v769
      %v771 = vcombine.low %v293, %v299
      %v772 = vcombine.high %v293, %v299
      %v774 = vunpack.c.l.s4 1983009808
      %v775 = vunpack.c.0.s8 %v774
      %v776 = vlaneseq
      %v777 = vshrl.u32 %v776, 7
      %v778 = vsub.s32 %v775, %v777
      %v779 = vrot.slane %v771, %v778
      %v781 = vunpack.c.l.s4 1983009808
      %v782 = vunpack.c.0.s8 %v781
      %v783 = vlaneseq
      %v784 = vshrl.u32 %v783, 7
      %v785 = vsub.s32 %v782, %v784
      %v786 = vrot.slane %v772, %v785
      %v787 = vcombine.low %v296, %v302
      %v788 = vcombine.high %v296, %v302
      %v790 = vunpack.c.l.s4 1983009808
      %v791 = vunpack.c.0.s8 %v790
      %v792 = vlaneseq
      %v793 = vshrl.u32 %v792, 7
      %v794 = vsub.s32 %v791, %v793
      %v795 = vrot.slane %v787, %v794
      %v797 = vunpack.c.l.s4 1983009808
      %v798 = vunpack.c.0.s8 %v797
      %v799 = vlaneseq
      %v800 = vshrl.u32 %v799, 7
      %v801 = vsub.s32 %v798, %v800
      %v802 = vrot.slane %v788, %v801
      %v803 = vcombine.low %v747, %v763
      %v804 = vcombine.high %v747, %v763
      %v806 = vunpack.c.l.s4 1934713408
      %v807 = vunpack.c.0.s8 %v806
      %v808 = vlaneseq
      %v809 = vshrl.u32 %v808, 7
      %v810 = vsub.s32 %v807, %v809
      %v811 = vrot.slane %v803, %v810
      %v813 = vunpack.c.l.s4 1934713408
      %v814 = vunpack.c.0.s8 %v813
      %v815 = vlaneseq
      %v816 = vshrl.u32 %v815, 7
      %v817 = vsub.s32 %v814, %v816
      %v818 = vrot.slane %v804, %v817
      %v819 = vcombine.low %v754, %v770
      %v820 = vcombine.high %v754, %v770
      %v822 = vunpack.c.l.s4 1934713408
      %v823 = vunpack.c.0.s8 %v822
      %v824 = vlaneseq
      %v825 = vshrl.u32 %v824, 7
      %v826 = vsub.s32 %v823, %v825
      %v827 = vrot.slane %v819, %v826
      %v829 = vunpack.c.l.s4 1934713408
      %v830 = vunpack.c.0.s8 %v829
      %v831 = vlaneseq
      %v832 = vshrl.u32 %v831, 7
      %v833 = vsub.s32 %v830, %v832
      %v834 = vrot.slane %v820, %v833
      %v835 = vcombine.low %v779, %v795
      %v836 = vcombine.high %v779, %v795
      %v838 = vunpack.c.l.s4 1934713408
      %v839 = vunpack.c.0.s8 %v838
      %v840 = vlaneseq
      %v841 = vshrl.u32 %v840, 7
      %v842 = vsub.s32 %v839, %v841
      %v843 = vrot.slane %v835, %v842
      %v845 = vunpack.c.l.s4 1934713408
      %v846 = vunpack.c.0.s8 %v845
      %v847 = vlaneseq
      %v848 = vshrl.u32 %v847, 7
      %v849 = vsub.s32 %v846, %v848
      %v850 = vrot.slane %v836, %v849
      %v851 = vcombine.low %v786, %v802
      %v852 = vcombine.high %v786, %v802
      %v854 = vunpack.c.l.s4 1934713408
      %v855 = vunpack.c.0.s8 %v854
      %v856 = vlaneseq
      %v857 = vshrl.u32 %v856, 7
      %v858 = vsub.s32 %v855, %v857
      %v859 = vrot.slane %v851, %v858
      %v861 = vunpack.c.l.s4 1934713408
      %v862 = vunpack.c.0.s8 %v861
      %v863 = vlaneseq
      %v864 = vshrl.u32 %v863, 7
      %v865 = vsub.s32 %v862, %v864
      %v866 = vrot.slane %v852, %v865
      %v867 = vcombine.low %v811, %v843
      %v868 = vcombine.high %v811, %v843
      %v869 = vcombine.low %v818, %v850
      %v870 = vcombine.high %v818, %v850
      %v871 = vcombine.low %v827, %v859
      %v872 = vcombine.high %v827, %v859
      %v873 = vcombine.low %v834, %v866
      %v874 = vcombine.high %v834, %v866
      %v875 = vcombine.low %v317, %v323
      %v876 = vcombine.high %v317, %v323
      %v878 = vunpack.c.l.s4 1983009808
      %v879 = vunpack.c.0.s8 %v878
      %v880 = vlaneseq
      %v881 = vshrl.u32 %v880, 7
      %v882 = vsub.s32 %v879, %v881
      %v883 = vrot.slane %v875, %v882
      %v885 = vunpack.c.l.s4 1983009808
      %v886 = vunpack.c.0.s8 %v885
      %v887 = vlaneseq
      %v888 = vshrl.u32 %v887, 7
      %v889 = vsub.s32 %v886, %v888
      %v890 = vrot.slane %v876, %v889
      %v891 = vcombine.low %v320, %v326
      %v892 = vcombine.high %v320, %v326
      %v894 = vunpack.c.l.s4 1983009808
      %v895 = vunpack.c.0.s8 %v894
      %v896 = vlaneseq
      %v897 = vshrl.u32 %v896, 7
      %v898 = vsub.s32 %v895, %v897
      %v899 = vrot.slane %v891, %v898
      %v901 = vunpack.c.l.s4 1983009808
      %v902 = vunpack.c.0.s8 %v901
      %v903 = vlaneseq
      %v904 = vshrl.u32 %v903, 7
      %v905 = vsub.s32 %v902, %v904
      %v906 = vrot.slane %v892, %v905
      %v907 = vcombine.low %v883, %v899
      %v908 = vcombine.high %v883, %v899
      %v910 = vunpack.c.l.s4 1934713408
      %v911 = vunpack.c.0.s8 %v910
      %v912 = vlaneseq
      %v913 = vshrl.u32 %v912, 7
      %v914 = vsub.s32 %v911, %v913
      %v915 = vrot.slane %v907, %v914
      %v917 = vunpack.c.l.s4 1934713408
      %v918 = vunpack.c.0.s8 %v917
      %v919 = vlaneseq
      %v920 = vshrl.u32 %v919, 7
      %v921 = vsub.s32 %v918, %v920
      %v922 = vrot.slane %v908, %v921
      %v923 = vcombine.low %v890, %v906
      %v924 = vcombine.high %v890, %v906
      %v926 = vunpack.c.l.s4 1934713408
      %v927 = vunpack.c.0.s8 %v926
      %v928 = vlaneseq
      %v929 = vshrl.u32 %v928, 7
      %v930 = vsub.s32 %v927, %v929
      %v931 = vrot.slane %v923, %v930
      %v933 = vunpack.c.l.s4 1934713408
      %v934 = vunpack.c.0.s8 %v933
      %v935 = vlaneseq
      %v936 = vshrl.u32 %v935, 7
      %v937 = vsub.s32 %v934, %v936
      %v938 = vrot.slane %v924, %v937
      %v939 = vcombine.high %v915, 0.0
      %v940 = vcombine.high %v922, 0.0
      %v941 = vcombine.high %v931, 0.0
      %v942 = vcombine.high %v938, 0.0
      %948 = vrot.lane.b32.xlu0 %v460, 8
      %v949 = vpop.permute.xlu0 %948
      %950 = vrot.lane.b32.xlu0 %v596, 8
      %v951 = vpop.permute.xlu0 %950
      %952 = vrot.lane.b32.xlu0 %v732, 8
      %v953 = vpop.permute.xlu0 %952
      %954 = vrot.lane.b32.xlu0 %v868, 8
      %v955 = vpop.permute.xlu0 %954
      %956 = vrot.lane.b32.xlu0 %v939, 8
      %v957 = vpop.permute.xlu0 %956
      %968 = vrot.lane.b32.xlu0 %v461, 16
      %v969 = vpop.permute.xlu0 %968
      %970 = vrot.lane.b32.xlu0 %v597, 16
      %v971 = vpop.permute.xlu0 %970
      %972 = vrot.lane.b32.xlu0 %v733, 16
      %v973 = vpop.permute.xlu0 %972
      %974 = vrot.lane.b32.xlu0 %v869, 16
      %v975 = vpop.permute.xlu0 %974
      %976 = vrot.lane.b32.xlu0 %v922, 16
      %v977 = vpop.permute.xlu0 %976
      %988 = vrot.lane.b32.xlu0 %v462, 24
      %v989 = vpop.permute.xlu0 %988
      %990 = vrot.lane.b32.xlu0 %v598, 24
      %v991 = vpop.permute.xlu0 %990
      %992 = vrot.lane.b32.xlu0 %v734, 24
      %v993 = vpop.permute.xlu0 %992
      %994 = vrot.lane.b32.xlu0 %v870, 24
      %v995 = vpop.permute.xlu0 %994
      %996 = vrot.lane.b32.xlu0 %v940, 24
      %v997 = vpop.permute.xlu0 %996
      %1008 = vrot.lane.b32.xlu0 %v463, 32
      %v1009 = vpop.permute.xlu0 %1008
      %1010 = vrot.lane.b32.xlu0 %v599, 32
      %v1011 = vpop.permute.xlu0 %1010
      %1012 = vrot.lane.b32.xlu0 %v735, 32
      %v1013 = vpop.permute.xlu0 %1012
      %1014 = vrot.lane.b32.xlu0 %v871, 32
      %v1015 = vpop.permute.xlu0 %1014
      %1016 = vrot.lane.b32.xlu0 %v931, 32
      %v1017 = vpop.permute.xlu0 %1016
      %1028 = vrot.lane.b32.xlu0 %v464, 40
      %v1029 = vpop.permute.xlu0 %1028
      %1030 = vrot.lane.b32.xlu0 %v600, 40
      %v1031 = vpop.permute.xlu0 %1030
      %1032 = vrot.lane.b32.xlu0 %v736, 40
      %v1033 = vpop.permute.xlu0 %1032
      %1034 = vrot.lane.b32.xlu0 %v872, 40
      %v1035 = vpop.permute.xlu0 %1034
      %1036 = vrot.lane.b32.xlu0 %v941, 40
      %v1037 = vpop.permute.xlu0 %1036
      %1048 = vrot.lane.b32.xlu0 %v465, 48
      %v1049 = vpop.permute.xlu0 %1048
      %1050 = vrot.lane.b32.xlu0 %v601, 48
      %v1051 = vpop.permute.xlu0 %1050
      %1052 = vrot.lane.b32.xlu0 %v737, 48
      %v1053 = vpop.permute.xlu0 %1052
      %1054 = vrot.lane.b32.xlu0 %v873, 48
      %v1055 = vpop.permute.xlu0 %1054
      %1056 = vrot.lane.b32.xlu0 %v938, 48
      %v1057 = vpop.permute.xlu0 %1056
      %1068 = vrot.lane.b32.xlu0 %v466, 56
      %v1069 = vpop.permute.xlu0 %1068
      %1070 = vrot.lane.b32.xlu0 %v602, 56
      %v1071 = vpop.permute.xlu0 %1070
      %1072 = vrot.lane.b32.xlu0 %v738, 56
      %v1073 = vpop.permute.xlu0 %1072
      %1074 = vrot.lane.b32.xlu0 %v874, 56
      %v1075 = vpop.permute.xlu0 %1074
      %1076 = vrot.lane.b32.xlu0 %v942, 56
      %v1077 = vpop.permute.xlu0 %1076
      %vm1083 = vcmask 64512
      %v1084 = vsel %vm1083, %v459, %v949
      %v1085 = vsel %vm1083, %v595, %v951
      %v1086 = vsel %vm1083, %v731, %v953
      %v1087 = vsel %vm1083, %v867, %v955
      %v1088 = vsel %vm1083, %v915, %v957
      %vm1089 = vcmask 130048
      %v1090 = vsel %vm1089, %v1084, %v969
      %v1091 = vsel %vm1089, %v1085, %v971
      %v1092 = vsel %vm1089, %v1086, %v973
      %v1093 = vsel %vm1089, %v1087, %v975
      %v1094 = vsel %vm1089, %v1088, %v977
      %vm1095 = vcmask 195584
      %v1096 = vsel %vm1095, %v1090, %v989
      %v1097 = vsel %vm1095, %v1091, %v991
      %v1098 = vsel %vm1095, %v1092, %v993
      %v1099 = vsel %vm1095, %v1093, %v995
      %v1100 = vsel %vm1095, %v1094, %v997
      %vm1101 = vcmask 261120
      %v1102 = vsel %vm1101, %v1096, %v1009
      %v1103 = vsel %vm1101, %v1097, %v1011
      %v1104 = vsel %vm1101, %v1098, %v1013
      %v1105 = vsel %vm1101, %v1099, %v1015
      %v1106 = vsel %vm1101, %v1100, %v1017
      %vm1107 = vcmask 326656
      %v1108 = vsel %vm1107, %v1102, %v1029
      %v1109 = vsel %vm1107, %v1103, %v1031
      %v1110 = vsel %vm1107, %v1104, %v1033
      %v1111 = vsel %vm1107, %v1105, %v1035
      %v1112 = vsel %vm1107, %v1106, %v1037
      %vm1113 = vcmask 392192
      %v1114 = vsel %vm1113, %v1108, %v1049
      %v1115 = vsel %vm1113, %v1109, %v1051
      %v1116 = vsel %vm1113, %v1110, %v1053
      %v1117 = vsel %vm1113, %v1111, %v1055
      %v1118 = vsel %vm1113, %v1112, %v1057
      %vm1119 = vcmask 457728
      %v1120 = vsel %vm1119, %v1114, %v1069
      %v1121 = vsel %vm1119, %v1115, %v1071
      %v1122 = vsel %vm1119, %v1116, %v1073
      %v1123 = vsel %vm1119, %v1117, %v1075
      %v1124 = vsel %vm1119, %v1118, %v1077
      %v1125 = vld [vmem:[%s1] sm:$0xf]
      %vm1126 = vcmask 293888
      %v1128 = vsel %vm1126, %v1125, 0
      %vm1130 = vcmask 1043456
      %v1132 = vsel %vm1130, %v1124, 0
      %1134 = vmatprep.subr.mxu0 0.0
      %1135 = vmatpush1.msra.mxu0 %v1120
      %1136 = vmatprep.subr.mxu0 0.0
      %1137 = vmatpush1.msra.mxu0 %v1121
      %1138 = vmatprep.subr.mxu0 0.0
      %1139 = vmatpush1.msra.mxu0 %v1122
      %1140 = vmatprep.subr.mxu0 0.0
      %1141 = vmatpush1.msra.mxu0 %v1123
      %1142 = vmatprep.subr.mxu0 0.0
      %1143 = vmatpush1.msra.mxu0 %v1132
      %1144 = vmatprep.subr.mxu0 0.0
      %1145 = vmatpush1.msra.mxu0 0.0
      %1146 = vmatprep.subr.mxu0 0.0
      %1147 = vmatpush1.msra.mxu0 0.0
      %1148 = vmatprep.subr.mxu0 0.0
      %1149 = vmatpush1.msra.mxu0 0.0
      %1150 = vmatprep.subr.mxu0 0.0
      %1151 = vmatpush1.msra.mxu0 0.0
      %1152 = vmatprep.subr.mxu0 0.0
      %1153 = vmatpush1.msra.mxu0 0.0
      %1154 = vmatprep.subr.mxu0 0.0
      %1155 = vmatpush1.msra.mxu0 0.0
      %1156 = vmatprep.subr.mxu0 0.0
      %1157 = vmatpush1.msra.mxu0 0.0
      %1158 = vmatprep.subr.mxu0 0.0
      %1159 = vmatpush1.msra.mxu0 0.0
      %1160 = vmatprep.subr.mxu0 0.0
      %1161 = vmatpush1.msra.mxu0 0.0
      %1162 = vmatprep.subr.mxu0 0.0
      %1163 = vmatpush1.msra.mxu0 0.0
      %1164 = vmatprep.subr.mxu0 0.0
      %1165 = vmatpush1.msra.mxu0 0.0
      %1166 = vmatprep.subr.mxu0 0.0
      %1167 = vmatpush1.msra.mxu0 0.0
      %1168 = vmatprep.subr.mxu0 0.0
      %1169 = vmatpush1.msra.mxu0 0.0
      %1170 = vmatprep.subr.mxu0 0.0
      %1171 = vmatpush1.msra.mxu0 0.0
      %1172 = vmatprep.subr.mxu0 0.0
      %1173 = vmatpush1.msra.mxu0 0.0
      %1174 = vmatprep.subr.mxu0 0.0
      %1175 = vmatpush1.msra.mxu0 0.0
      %1176 = vmatprep.subr.mxu0 0.0
      %1177 = vmatpush1.msra.mxu0 0.0
      %1178 = vmatprep.subr.mxu0 0.0
      %1179 = vmatpush1.msra.mxu0 0.0
      %1180 = vmatprep.subr.mxu0 0.0
      %1181 = vmatpush1.msra.mxu0 0.0
      %1182 = vmatprep.subr.mxu0 0.0
      %1183 = vmatpush1.msra.mxu0 0.0
      %1184 = vmatprep.subr.mxu0 0.0
      %1185 = vmatpush1.msra.mxu0 0.0
      %1186 = vmatprep.subr.mxu0 0.0
      %1187 = vmatpush1.msra.mxu0 0.0
      %1188 = vmatprep.subr.mxu0 0.0
      %1189 = vmatpush1.msra.mxu0 0.0
      %1190 = vmatprep.subr.mxu0 0.0
      %1191 = vmatpush1.msra.mxu0 0.0
      %1192 = vmatprep.subr.mxu0 0.0
      %1193 = vmatpush1.msra.mxu0 0.0
      %1194 = vmatprep.subr.mxu0 0.0
      %1195 = vmatpush1.msra.mxu0 0.0
      %1196 = vmatprep.subr.mxu0 0.0
      %1197 = vmatpush1.msra.mxu0 0.0
      %1198 = vmatprep.mubr.f32.mxu0 0.0
      %1199 = vmatmul.mubr.f32.gmra.mrb[0].mxu0 %v1128
      %v1200 = vpop.f32.mrb[0].mxu0
      %v1201 = vadd.f32 0.0, %v1200
      %v1202 = vpop.f32.mrb[0].mxu0
      %1203 = vdwg.mxu0
      %vm1204 = vcmask 519168
      %1205 = vst.msk [vmem:[%s214] sm:$0xf] %vm1204, %v1201
      %v1206 = vsel %vm1204, %v1201, 0.0
      %1207 = vadd.xlane.f32.xlu0 %v1206
      %v1208 = vpop.xlane.xlu0 %1207
      %v1209 = vmul.f32 %v1201, %v1201
      %v1210 = vsel %vm1204, %v1209, 0.0
      %1211 = vadd.xlane.f32.xlu0 %v1210
      %v1212 = vpop.xlane.xlu0 %1211
      %vm1213 = vcmask 7168
      %v1214 = vsel %vm1213, %v1208, %v1212
      %vm1215 = vcmask 11264
      %1216 = vst.msk [vmem:[%s221] sm:$0xf] %vm1215, %v1214
      %p1217 = scmp.lt.s32.totalorder %s19, 1
      %s1218 = scalar_select %p1217, %s19, 1
      %p1219 = scmp.lt.s32.totalorder %s20, 0
      %s1220 = scalar_select %p1219, %s20, 0
      %s1221 = sadd.s32 %s1220, %s1218
      %s1222 = smul.addr %s1221, 4
      %s1223 = scalar_lea.vmem %s2, %s1222
      %p1224 = scmp.lt.s32.totalorder %s19, 1
      %s1225 = scalar_select %p1224, %s19, 1
      %p1226 = scmp.lt.s32.totalorder %s20, 0
      %s1227 = scalar_select %p1226, %s20, 0
      %s1228 = sadd.s32 %s1227, %s1225
      %s1229 = smul.addr %s1228, 4
      %s1230 = scalar_lea.vmem %s3, %s1229
      // Predicated region
      $region29: #{_downsample.2} parent=27 // pred_check
        %p1231 = pneg %p96
      $region30: #{_downsample.2} parent=27 // pred_check_branch
        %1233 = sbr.rel (%p1231) target = $region32
      $region31: #{_downsample.2} parent=27 // pred_region
        _
      $region32: #{_downsample.2} parent=27 // pred_fallthru
        _
      // Predicated region
      $region33: #{_downsample.2} parent=27 // pred_check
        %p1234 = pneg %p124
      $region34: #{_downsample.2} parent=27 // pred_check_branch
        %1236 = sbr.rel (%p1234) target = $region36
      $region35: #{_downsample.2} parent=27 // pred_region
        _
      $region36: #{_downsample.2} parent=27 // pred_fallthru
        _
    $region28: #{_downsample.2} parent=5 // pred_fallthru
      _
    %p1237 = scmp.le.s32.totalorder 2, %s10
    // Predicated region
    $region37: #{_downsample.2} parent=5 // pred_check
      %p1238 = pneg %p1237
    $region38: #{_downsample.2} parent=5 // pred_check_branch
      %1240 = sbr.rel (%p1238) target = $region40
    $region39: #{_downsample.2} parent=5 // pred_region
      %s1241 = ssub.s32 %s10, 2
      // Predicated region
      $region41: #{_downsample.2} parent=39 // pred_check
        %p1242 = pneg %p102
      $region42: #{_downsample.2} parent=39 // pred_check_branch
        %1244 = sbr.rel (%p1242) target = $region44
      $region43: #{_downsample.2} parent=39 // pred_region
        %p1245 = scmp.lt.s32.totalorder %s21, 1
        %s1246 = scalar_select %p1245, %s21, 1
        %p1247 = scmp.lt.s32.totalorder %s22, 0
        %s1248 = scalar_select %p1247, %s22, 0
        %s1249 = sadd.s32 %s1248, %s1246
        %s1250 = smul.addr %s1249, 4
        %s1251 = scalar_lea.vmem %s2, %s1250
      $region44: #{_downsample.2} parent=39 // pred_fallthru
        _
      // Predicated region
      $region45: #{_downsample.2} parent=39 // pred_check
        %p1252 = pneg %p130
      $region46: #{_downsample.2} parent=39 // pred_check_branch
        %1254 = sbr.rel (%p1252) target = $region48
      $region47: #{_downsample.2} parent=39 // pred_region
        %p1255 = scmp.lt.s32.totalorder %s21, 1
        %s1256 = scalar_select %p1255, %s21, 1
        %p1257 = scmp.lt.s32.totalorder %s22, 0
        %s1258 = scalar_select %p1257, %s22, 0
        %s1259 = sadd.s32 %s1258, %s1256
        %s1260 = smul.addr %s1259, 4
        %s1261 = scalar_lea.vmem %s3, %s1260
      $region48: #{_downsample.2} parent=39 // pred_fallthru
        _
    $region40: #{_downsample.2} parent=5 // pred_fallthru
      _
  $region6: #{_downsample.2} parent=0 // loop_footer
    %s14 = sadd.s32 1, %s10
  $region7: #{_downsample.2} parent=0 // loop_footer_branch
    %9 = sbr.rel target = $region3
  $region8: #{_downsample.2} parent=0 // loop_exit
    _

</llo_original>
